<compile_context>
chip_gen: v7x
topology: tpu7x:2x2x1
jax: 0.10.0
libtpu: 0.0.40
codegen_flags: <defaults>
</compile_context>

<pallas_src>
import jax
import jax.numpy as jnp
from jax.experimental import pallas as pl
from jax.experimental.pallas import tpu as pltpu

NEG_SLOPE = 0.2   # LeakyReLU negative_slope (l_alpha)
LANE = 128        # every per-edge-type out_dim block is padded to one lane tile
N_ROWS = 8        # node axis padded to one sublane tile
NEG_BIG = -1e30   # mask value for non-edges (matches the reference)


# ----------------------------------------------------------------------------
# Kernel
# ----------------------------------------------------------------------------
def _make_kernel(n_p, n_a):
    """Build the fused HeteroGAT kernel for fixed (tiny) node counts."""
    D = LANE
    n_rows = N_ROWS

    def kernel(feat_ref, w_ref, aux_ref, out_ref):
        # ---- 1 fused transform matmul (all six Linears; biases folded via the
        #      ones-columns of the feature slab).
        # wh layout per node row: [Wh_self | Wh_->P | Wh_->A], 128 lanes each.
        # Padded node rows are all-zero and stay zero.
        wh = jnp.dot(feat_ref[...], w_ref[...],
                     preferred_element_type=jnp.float32)                    # (8, 384)

        attn = aux_ref[0:n_rows, :]                                          # (8, 384)
        adj = aux_ref[n_rows:2 * n_rows, 0:n_rows]                           # (8, 8)

        # ---- 2 score matmuls: all 8 per-edge-type src/dst scores at once.
        dn = (((1,), (1,)), ((), ()))
        col_s = jax.lax.dot_general(wh, attn, dn,
                                    preferred_element_type=jnp.float32)     # (node, score)
        row_s = jax.lax.dot_general(attn, wh, dn,
                                    preferred_element_type=jnp.float32)     # (score, node)

        rows_p = jax.lax.broadcasted_iota(jnp.int32, (n_rows, 1), 0) < n_p
        cols_p = jax.lax.broadcasted_iota(jnp.int32, (1, n_rows), 1) < n_p
        row_is_p = jax.lax.broadcasted_iota(jnp.int32, (n_rows, n_rows), 0) < n_p
        col_is_p = jax.lax.broadcasted_iota(jnp.int32, (n_rows, n_rows), 1) < n_p

        # dst score depends on (dst node, src type); src score on (src node, dst type).
        # attn rows: 0 dst_p2p, 1 dst_a2p, 2 dst_p2a, 3 dst_a2a,
        #            4 src_p2p, 5 src_a2p, 6 src_p2a, 7 src_a2a
        dst_from_p = jnp.where(rows_p, col_s[:, 0:1], col_s[:, 2:3])        # (8, 1)
        dst_from_a = jnp.where(rows_p, col_s[:, 1:2], col_s[:, 3:4])        # (8, 1)
        src_to_p = jnp.where(cols_p, row_s[4:5, :], row_s[5:6, :])          # (1, 8)
        src_to_a = jnp.where(cols_p, row_s[6:7, :], row_s[7:8, :])          # (1, 8)

        dst_term = jnp.where(col_is_p,
                             jnp.broadcast_to(dst_from_p, (n_rows, n_rows)),
                             jnp.broadcast_to(dst_from_a, (n_rows, n_rows)))
        src_term = jnp.where(row_is_p,
                             jnp.broadcast_to(src_to_p, (n_rows, n_rows)),
                             jnp.broadcast_to(src_to_a, (n_rows, n_rows)))
        e = dst_term + src_term
        e = jnp.where(e > 0, e, NEG_SLOPE * e)                               # LeakyReLU
        e = jnp.where(adj > 0, e, NEG_BIG)                                   # mask BEFORE max

        # ---- 1 fused masked-softmax chain; per src-type (edge-type) segments.
        e_p = jnp.where(col_is_p, e, NEG_BIG)
        e_a = jnp.where(col_is_p, NEG_BIG, e)
        m_p = jnp.max(e_p, axis=1, keepdims=True)
        m_a = jnp.max(e_a, axis=1, keepdims=True)
        m = jnp.where(col_is_p, jnp.broadcast_to(m_p, (n_rows, n_rows)),
                      jnp.broadcast_to(m_a, (n_rows, n_rows)))
        p = jnp.exp(e - m) * adj
        p_from_p = jnp.where(col_is_p, p, 0.0)
        p_from_a = p - p_from_p
        den_p = jnp.sum(p_from_p, axis=1, keepdims=True)
        den_a = jnp.sum(p_from_a, axis=1, keepdims=True)
        den_p = jnp.where(den_p == 0.0, 1.0, den_p)    # zero in-degree -> zero contribution
        den_a = jnp.where(den_a == 0.0, 1.0, den_a)
        den = jnp.where(col_is_p, jnp.broadcast_to(den_p, (n_rows, n_rows)),
                        jnp.broadcast_to(den_a, (n_rows, n_rows)))
        alpha = p / den                 # exact divide (approx reciprocal broke 2e-3 parity)

        # ---- 1 fused aggregation matmul over the [->P | ->A] message slab
        #      (a free lane-aligned view of wh); multi_update_all 'sum' comes
        #      out automatically since both src-type blocks are in one dot.
        recv = jnp.dot(alpha, wh[:, D:3 * D],
                       preferred_element_type=jnp.float32)                   # (8, 256)
        rows_p_d = jax.lax.broadcasted_iota(jnp.int32, (n_rows, D), 0) < n_p
        h_recv = jnp.where(rows_p_d, recv[:, 0:D], recv[:, D:2 * D])         # (8, 128)

        # h = relu(Wh_self + h_recv); padded node rows come out exactly zero.
        out_ref[...] = jnp.maximum(wh[:, 0:D] + h_recv, 0.0)  # single full-tile store

    return kernel


# ----------------------------------------------------------------------------
# Wrapper
# ----------------------------------------------------------------------------
def hetero_gat_real(feat_slab, w_slab, aux_slab, n_p, n_a, out_dim):
    """Pallas-backed forward on host-packed slabs. Returns {'P': h_P, 'A': h_A}."""
    vmem = pl.BlockSpec(memory_space=pltpu.MemorySpace.VMEM)
    flops = (2 * N_ROWS * feat_slab.shape[1] * w_slab.shape[1]       # fused transform
             + 2 * 2 * N_ROWS * aux_slab.shape[1] * N_ROWS           # 2 score matmuls
             + 2 * N_ROWS * N_ROWS * 2 * LANE)                       # aggregation
    bytes_accessed = 4 * (feat_slab.size + w_slab.size + aux_slab.size + N_ROWS * LANE)

    out = pl.pallas_call(
        _make_kernel(n_p, n_a),
        out_shape=jax.ShapeDtypeStruct((N_ROWS, LANE), jnp.float32),
        in_specs=[vmem, vmem, vmem],
        out_specs=vmem,
        cost_estimate=pl.CostEstimate(
            flops=int(flops),
            transcendentals=int(N_ROWS * N_ROWS),
            bytes_accessed=int(bytes_accessed)),
    )(feat_slab, w_slab, aux_slab)

    h_p = out[0:n_p, 0:out_dim['P']]
    h_a = out[n_p:n_p + n_a, 0:out_dim['A']]
    return {'P': h_p, 'A': h_a}


# ----------------------------------------------------------------------------
# Host-side packing (done once; all in-kernel slices become free views)
# ----------------------------------------------------------------------------
def pack_operands(feat_p, feat_a, params, adjs, k_pad=LANE):
    """Pack features, weights(+biases), attention projections and adjacency
    into 3 slabs: feat (8, 128), w_all (128, 384), aux (16, 384)."""
    (w_p, b_p, w_a, b_a,
     w_p2p, b_p2p, w_p2a, b_p2a,
     w_a2p, b_a2p, w_a2a, b_a2a,
     a_p2p, a_p2a, a_a2p, a_a2a) = params
    n_p, in_p = feat_p.shape
    n_a, in_a = feat_a.shape
    n_tot = n_p + n_a
    assert n_tot <= N_ROWS and in_p + in_a + 2 <= k_pad
    assert max(w_p.shape[1], w_a.shape[1]) <= LANE    # out_dims must fit one lane tile
    bias_p_col, bias_a_col = in_p + in_a, in_p + in_a + 1

    # --- feature slab: block-diag feature columns + per-type ones-columns (bias fold)
    feat = jnp.zeros((N_ROWS, k_pad), jnp.float32)
    feat = feat.at[0:n_p, 0:in_p].set(feat_p)
    feat = feat.at[n_p:n_tot, in_p:in_p + in_a].set(feat_a)
    feat = feat.at[0:n_p, bias_p_col].set(1.0)
    feat = feat.at[n_p:n_tot, bias_a_col].set(1.0)

    # --- weight slab: out-blocks [self | ->P | ->A]; P-input rows, A-input rows,
    #     then the two bias rows picked up by the ones-columns above.
    w_all = jnp.zeros((k_pad, 3 * LANE), jnp.float32)
    w_all = w_all.at[0:in_p, 0:w_p.shape[1]].set(w_p)
    w_all = w_all.at[0:in_p, LANE:LANE + w_p2p.shape[1]].set(w_p2p)
    w_all = w_all.at[0:in_p, 2 * LANE:2 * LANE + w_p2a.shape[1]].set(w_p2a)
    w_all = w_all.at[in_p:in_p + in_a, 0:w_a.shape[1]].set(w_a)
    w_all = w_all.at[in_p:in_p + in_a, LANE:LANE + w_a2p.shape[1]].set(w_a2p)
    w_all = w_all.at[in_p:in_p + in_a, 2 * LANE:2 * LANE + w_a2a.shape[1]].set(w_a2a)
    w_all = w_all.at[bias_p_col, 0:b_p.shape[1]].set(b_p[0])
    w_all = w_all.at[bias_p_col, LANE:LANE + b_p2p.shape[1]].set(b_p2p[0])
    w_all = w_all.at[bias_p_col, 2 * LANE:2 * LANE + b_p2a.shape[1]].set(b_p2a[0])
    w_all = w_all.at[bias_a_col, 0:b_a.shape[1]].set(b_a[0])
    w_all = w_all.at[bias_a_col, LANE:LANE + b_a2p.shape[1]].set(b_a2p[0])
    w_all = w_all.at[bias_a_col, 2 * LANE:2 * LANE + b_a2a.shape[1]].set(b_a2a[0])

    # --- aux slab: attention-projection rows (aligned with the wh block layout)
    #     + combined dense adjacency (dst rows, src cols; P nodes first).
    aux = jnp.zeros((2 * N_ROWS, 3 * LANE), jnp.float32)
    aux = aux.at[0, 0:a_p2p.shape[1]].set(a_p2p[1])                       # dst p2p (block 0)
    aux = aux.at[1, 0:a_a2p.shape[1]].set(a_a2p[1])                       # dst a2p (block 0)
    aux = aux.at[2, 0:a_p2a.shape[1]].set(a_p2a[1])                       # dst p2a (block 0)
    aux = aux.at[3, 0:a_a2a.shape[1]].set(a_a2a[1])                       # dst a2a (block 0)
    aux = aux.at[4, LANE:LANE + a_p2p.shape[1]].set(a_p2p[0])             # src p2p (block 1)
    aux = aux.at[5, LANE:LANE + a_a2p.shape[1]].set(a_a2p[0])             # src a2p (block 1)
    aux = aux.at[6, 2 * LANE:2 * LANE + a_p2a.shape[1]].set(a_p2a[0])     # src p2a (block 2)
    aux = aux.at[7, 2 * LANE:2 * LANE + a_a2a.shape[1]].set(a_a2a[0])     # src a2a (block 2)
    adj_p2p, adj_p2a, adj_a2p, adj_a2a = adjs
    aux = aux.at[N_ROWS:N_ROWS + n_p, 0:n_p].set(adj_p2p)
    aux = aux.at[N_ROWS:N_ROWS + n_p, n_p:n_tot].set(adj_a2p)
    aux = aux.at[N_ROWS + n_p:N_ROWS + n_tot, 0:n_p].set(adj_p2a)
    aux = aux.at[N_ROWS + n_p:N_ROWS + n_tot, n_p:n_tot].set(adj_a2a)
    return feat, w_all, aux


# ----------------------------------------------------------------------------
# Pure-JAX reference of the ORIGINAL (unfused, unpacked) module math
# ----------------------------------------------------------------------------
def _reference_edge(wh_src_e, wh_dst, a_vec, adj):
    a_src, a_dst = a_vec[0:1, :], a_vec[1:2, :]
    e = (wh_dst @ a_dst.T) + (wh_src_e @ a_src.T).T        # (N_dst, N_src)
    e = jnp.where(e > 0, e, NEG_SLOPE * e)                 # LeakyReLU
    e = jnp.where(adj > 0, e, jnp.float32(-1e30))
    m = jnp.max(e, axis=1, keepdims=True)
    p = jnp.exp(e - m) * adj
    denom = jnp.sum(p, axis=1, keepdims=True)
    denom = jnp.where(denom == 0, jnp.float32(1.0), denom)
    return (p / denom) @ wh_src_e


def reference(feat_p, feat_a, params, adjs):
    (w_p, b_p, w_a, b_a,
     w_p2p, b_p2p, w_p2a, b_p2a,
     w_a2p, b_a2p, w_a2a, b_a2a,
     a_p2p, a_p2a, a_a2p, a_a2a) = params
    adj_p2p, adj_p2a, adj_a2p, adj_a2a = adjs
    wh_p = feat_p @ w_p + b_p
    wh_a = feat_a @ w_a + b_a
    wh_p2p = feat_p @ w_p2p + b_p2p
    wh_p2a = feat_p @ w_p2a + b_p2a
    wh_a2p = feat_a @ w_a2p + b_a2p
    wh_a2a = feat_a @ w_a2a + b_a2a
    h_recv_p = (_reference_edge(wh_p2p, wh_p, a_p2p, adj_p2p) +
                _reference_edge(wh_a2p, wh_p, a_a2p, adj_a2p))
    h_recv_a = (_reference_edge(wh_p2a, wh_a, a_p2a, adj_p2a) +
                _reference_edge(wh_a2a, wh_a, a_a2a, adj_a2a))
    return jnp.maximum(wh_p + h_recv_p, 0.0), jnp.maximum(wh_a + h_recv_a, 0.0)


# ----------------------------------------------------------------------------
# Parameter construction (xavier_normal gain=sqrt(2) like reset_parameters;
# small non-zero biases so the bias-folding path is actually exercised)
# ----------------------------------------------------------------------------
def make_params(key, in_dim, out_dim):
    gain = jnp.sqrt(2.0)

    def xavier(k, fan_in, fan_out, shape):
        std = gain * jnp.sqrt(2.0 / (fan_in + fan_out))
        return jax.random.normal(k, shape, jnp.float32) * std

    ks = jax.random.split(key, 16)
    ip, ia = in_dim['P'], in_dim['A']
    op, oa = out_dim['P'], out_dim['A']
    # nn.Linear weights stored transposed: (in, out)
    w_p   = xavier(ks[0], ip, op, (ip, op)); b_p   = 0.1 * jax.random.normal(ks[10], (1, op), jnp.float32)
    w_a   = xavier(ks[1], ia, oa, (ia, oa)); b_a   = 0.1 * jax.random.normal(ks[11], (1, oa), jnp.float32)
    w_p2p = xavier(ks[2], ip, op, (ip, op)); b_p2p = 0.1 * jax.random.normal(ks[12], (1, op), jnp.float32)
    w_p2a = xavier(ks[3], ip, oa, (ip, oa)); b_p2a = 0.1 * jax.random.normal(ks[13], (1, oa), jnp.float32)
    w_a2p = xavier(ks[4], ia, op, (ia, op)); b_a2p = 0.1 * jax.random.normal(ks[14], (1, op), jnp.float32)
    w_a2a = xavier(ks[5], ia, oa, (ia, oa)); b_a2a = 0.1 * jax.random.normal(ks[15], (1, oa), jnp.float32)
    # attn_fc_* : torch weight (1, 2*out), bias=False -> stored as (2, out):
    #   row 0 multiplies the src half, row 1 the dst half of the concat.
    a_p2p = xavier(ks[6], 2 * op, 1, (1, 2 * op)).reshape(2, op)
    a_p2a = xavier(ks[7], 2 * oa, 1, (1, 2 * oa)).reshape(2, oa)
    a_a2p = xavier(ks[8], 2 * op, 1, (1, 2 * op)).reshape(2, op)
    a_a2a = xavier(ks[9], 2 * oa, 1, (1, 2 * oa)).reshape(2, oa)
    return (w_p, b_p, w_a, b_a,
            w_p2p, b_p2p, w_p2a, b_p2a,
            w_a2p, b_a2p, w_a2a, b_a2a,
            a_p2p, a_p2a, a_a2p, a_a2a)


if __name__ == "__main__":
    key = jax.random.PRNGKey(0)
    in_dim = {'P': 32, 'A': 24}
    out_dim = {'P': 64, 'A': 48}
    N_P, N_A = 2, 1   # hard-coded by the module's reshape((2,-1)) / reshape((1,-1))

    k_feat_p, k_feat_a, k_params = jax.random.split(key, 3)
    feat_p = jax.random.normal(k_feat_p, (N_P, in_dim['P']), jnp.float32)
    feat_a = jax.random.normal(k_feat_a, (N_A, in_dim['A']), jnp.float32)
    params = make_params(k_params, in_dim, out_dim)

    # Dense adjacency masks (N_dst, N_src) per canonical edge type (fully connected toy graph).
    adjs = (jnp.ones((N_P, N_P), jnp.float32),   # p2p
            jnp.ones((N_A, N_P), jnp.float32),   # p2a
            jnp.ones((N_P, N_A), jnp.float32),   # a2p
            jnp.ones((N_A, N_A), jnp.float32))   # a2a

    # one-time host-side packing of features, parameters and graph structure
    feat_slab, w_slab, aux_slab = pack_operands(feat_p, feat_a, params, adjs)

    out = hetero_gat_real(feat_slab, w_slab, aux_slab, N_P, N_A, out_dim)
    jax.block_until_ready(out)
    h_p, h_a = out['P'], out['A']

    # check against a pure-JAX reference of the ORIGINAL unfused module math
    r_p, r_a = reference(feat_p, feat_a, params, adjs)
    assert h_p.shape == r_p.shape and h_a.shape == r_a.shape
    err_p = float(jnp.max(jnp.abs(h_p - r_p)))
    err_a = float(jnp.max(jnp.abs(h_a - r_a)))
    assert jnp.allclose(h_p, r_p, rtol=2e-3, atol=2e-3), err_p
    assert jnp.allclose(h_a, r_a, rtol=2e-3, atol=2e-3), err_a

    print("KERNEL_OK")
</pallas_src>

<mosaic_0001>
module attributes {stable_mosaic.version = 11 : i64} {
  func.func @kernel(%arg0: memref<8x128xf32, #tpu.memory_space<vmem>>, %arg1: memref<128x384xf32, #tpu.memory_space<vmem>>, %arg2: memref<16x384xf32, #tpu.memory_space<vmem>>, %arg3: memref<8x128xf32, #tpu.memory_space<vmem>>) attributes {dimension_semantics = [], scalar_prefetch = 0 : i64, scratch_operands = 0 : i64, tpu.core_type = #tpu.core_type<tc>} {
    %c0 = arith.constant 0 : index
    %c0_0 = arith.constant 0 : index
    %0 = vector.load %arg0[%c0, %c0_0] : memref<8x128xf32, #tpu.memory_space<vmem>>, vector<8x128xf32>
    %c0_1 = arith.constant 0 : index
    %c0_2 = arith.constant 0 : index
    %1 = vector.load %arg1[%c0_1, %c0_2] : memref<128x384xf32, #tpu.memory_space<vmem>>, vector<128x384xf32>
    %cst = arith.constant dense<0.000000e+00> : vector<8x384xf32>
    %2 = tpu.matmul %0, %1, %cst {dimension_numbers = #tpu.dot_dimension_numbers<[1], [0], [0], [1], [0, 0, 1, 1], [], []>} : vector<8x128xf32>, vector<128x384xf32>, vector<8x384xf32> -> vector<8x384xf32>
    %c0_3 = arith.constant 0 : index
    %c0_4 = arith.constant 0 : index
    %3 = vector.load %arg2[%c0_3, %c0_4] : memref<16x384xf32, #tpu.memory_space<vmem>>, vector<8x384xf32>
    %c8 = arith.constant 8 : index
    %c0_5 = arith.constant 0 : index
    %4 = vector.load %arg2[%c8, %c0_5] : memref<16x384xf32, #tpu.memory_space<vmem>>, vector<8x8xf32>
    %cst_6 = arith.constant dense<0.000000e+00> : vector<8x8xf32>
    %5 = tpu.matmul %2, %3, %cst_6 {dimension_numbers = #tpu.dot_dimension_numbers<[1], [1], [0], [0], [0, 0, 1, 0], [], []>} : vector<8x384xf32>, vector<8x384xf32>, vector<8x8xf32> -> vector<8x8xf32>
    %cst_7 = arith.constant dense<0.000000e+00> : vector<8x8xf32>
    %6 = tpu.matmul %3, %2, %cst_7 {dimension_numbers = #tpu.dot_dimension_numbers<[1], [1], [0], [0], [0, 0, 1, 0], [], []>} : vector<8x384xf32>, vector<8x384xf32>, vector<8x8xf32> -> vector<8x8xf32>
    %7 = tpu.iota {dimensions = array<i32: 0>} : vector<8x1xi32>
    %c2_i32 = arith.constant 2 : i32
    %8 = vector.broadcast %c2_i32 : i32 to vector<8x1xi32>
    %9 = arith.cmpi slt, %7, %8 : vector<8x1xi32>
    %10 = tpu.iota {dimensions = array<i32: 1>} : vector<1x8xi32>
    %c2_i32_8 = arith.constant 2 : i32
    %11 = vector.broadcast %c2_i32_8 : i32 to vector<1x8xi32>
    %12 = arith.cmpi slt, %10, %11 : vector<1x8xi32>
    %13 = tpu.iota {dimensions = array<i32: 0>} : vector<8x8xi32>
    %c2_i32_9 = arith.constant 2 : i32
    %14 = vector.broadcast %c2_i32_9 : i32 to vector<8x8xi32>
    %15 = arith.cmpi slt, %13, %14 : vector<8x8xi32>
    %16 = tpu.iota {dimensions = array<i32: 1>} : vector<8x8xi32>
    %c2_i32_10 = arith.constant 2 : i32
    %17 = vector.broadcast %c2_i32_10 : i32 to vector<8x8xi32>
    %18 = arith.cmpi slt, %16, %17 : vector<8x8xi32>
    %19 = vector.extract_strided_slice %5 {offsets = [0, 0], sizes = [8, 1], strides = [1, 1]} : vector<8x8xf32> to vector<8x1xf32>
    %20 = vector.extract_strided_slice %5 {offsets = [0, 2], sizes = [8, 1], strides = [1, 1]} : vector<8x8xf32> to vector<8x1xf32>
    %21 = arith.select %9, %19, %20 : vector<8x1xi1>, vector<8x1xf32>
    %22 = vector.extract_strided_slice %5 {offsets = [0, 1], sizes = [8, 1], strides = [1, 1]} : vector<8x8xf32> to vector<8x1xf32>
    %23 = vector.extract_strided_slice %5 {offsets = [0, 3], sizes = [8, 1], strides = [1, 1]} : vector<8x8xf32> to vector<8x1xf32>
    %24 = arith.select %9, %22, %23 : vector<8x1xi1>, vector<8x1xf32>
    %25 = vector.extract_strided_slice %6 {offsets = [4, 0], sizes = [1, 8], strides = [1, 1]} : vector<8x8xf32> to vector<1x8xf32>
    %26 = vector.extract_strided_slice %6 {offsets = [5, 0], sizes = [1, 8], strides = [1, 1]} : vector<8x8xf32> to vector<1x8xf32>
    %27 = arith.select %12, %25, %26 : vector<1x8xi1>, vector<1x8xf32>
    %28 = vector.extract_strided_slice %6 {offsets = [6, 0], sizes = [1, 8], strides = [1, 1]} : vector<8x8xf32> to vector<1x8xf32>
    %29 = vector.extract_strided_slice %6 {offsets = [7, 0], sizes = [1, 8], strides = [1, 1]} : vector<8x8xf32> to vector<1x8xf32>
    %30 = arith.select %12, %28, %29 : vector<1x8xi1>, vector<1x8xf32>
    %31 = vector.shape_cast %21 : vector<8x1xf32> to vector<8x1xf32>
    %32 = vector.broadcast %31 : vector<8x1xf32> to vector<8x8xf32>
    %33 = vector.shape_cast %24 : vector<8x1xf32> to vector<8x1xf32>
    %34 = vector.broadcast %33 : vector<8x1xf32> to vector<8x8xf32>
    %35 = arith.select %18, %32, %34 : vector<8x8xi1>, vector<8x8xf32>
    %36 = vector.shape_cast %27 : vector<1x8xf32> to vector<1x8xf32>
    %37 = vector.broadcast %36 : vector<1x8xf32> to vector<8x8xf32>
    %38 = vector.shape_cast %30 : vector<1x8xf32> to vector<1x8xf32>
    %39 = vector.broadcast %38 : vector<1x8xf32> to vector<8x8xf32>
    %40 = arith.select %15, %37, %39 : vector<8x8xi1>, vector<8x8xf32>
    %41 = arith.addf %35, %40 : vector<8x8xf32>
    %cst_11 = arith.constant 0.000000e+00 : f32
    %42 = vector.broadcast %cst_11 : f32 to vector<8x8xf32>
    %43 = arith.cmpf ogt, %41, %42 : vector<8x8xf32>
    %cst_12 = arith.constant 2.000000e-01 : f32
    %44 = vector.broadcast %cst_12 : f32 to vector<8x8xf32>
    %45 = arith.mulf %44, %41 : vector<8x8xf32>
    %46 = arith.select %43, %41, %45 : vector<8x8xi1>, vector<8x8xf32>
    %cst_13 = arith.constant 0.000000e+00 : f32
    %47 = vector.broadcast %cst_13 : f32 to vector<8x8xf32>
    %48 = arith.cmpf ogt, %4, %47 : vector<8x8xf32>
    %cst_14 = arith.constant -1.000000e+30 : f32
    %49 = vector.broadcast %cst_14 : f32 to vector<8x8xf32>
    %50 = arith.select %48, %46, %49 : vector<8x8xi1>, vector<8x8xf32>
    %cst_15 = arith.constant -1.000000e+30 : f32
    %51 = vector.broadcast %cst_15 : f32 to vector<8x8xf32>
    %52 = arith.select %18, %50, %51 : vector<8x8xi1>, vector<8x8xf32>
    %cst_16 = arith.constant -1.000000e+30 : f32
    %53 = vector.broadcast %cst_16 : f32 to vector<8x8xf32>
    %54 = arith.select %18, %53, %50 : vector<8x8xi1>, vector<8x8xf32>
    %cst_17 = arith.constant dense<0xFF800000> : vector<8xf32>
    %55 = vector.multi_reduction <maximumf>, %52, %cst_17 [1] : vector<8x8xf32> to vector<8xf32>
    %56 = vector.shape_cast %55 : vector<8xf32> to vector<8x1xf32>
    %cst_18 = arith.constant dense<0xFF800000> : vector<8xf32>
    %57 = vector.multi_reduction <maximumf>, %54, %cst_18 [1] : vector<8x8xf32> to vector<8xf32>
    %58 = vector.shape_cast %57 : vector<8xf32> to vector<8x1xf32>
    %59 = vector.shape_cast %56 : vector<8x1xf32> to vector<8x1xf32>
    %60 = vector.broadcast %59 : vector<8x1xf32> to vector<8x8xf32>
    %61 = vector.shape_cast %58 : vector<8x1xf32> to vector<8x1xf32>
    %62 = vector.broadcast %61 : vector<8x1xf32> to vector<8x8xf32>
    %63 = arith.select %18, %60, %62 : vector<8x8xi1>, vector<8x8xf32>
    %64 = arith.subf %50, %63 : vector<8x8xf32>
    %65 = math.exp %64 : vector<8x8xf32>
    %66 = arith.mulf %65, %4 : vector<8x8xf32>
    %cst_19 = arith.constant 0.000000e+00 : f32
    %67 = vector.broadcast %cst_19 : f32 to vector<8x8xf32>
    %68 = arith.select %18, %66, %67 : vector<8x8xi1>, vector<8x8xf32>
    %69 = arith.subf %66, %68 : vector<8x8xf32>
    %cst_20 = arith.constant dense<0.000000e+00> : vector<8xf32>
    %70 = vector.multi_reduction <add>, %68, %cst_20 [1] : vector<8x8xf32> to vector<8xf32>
    %71 = vector.shape_cast %70 : vector<8xf32> to vector<8x1xf32>
    %cst_21 = arith.constant dense<0.000000e+00> : vector<8xf32>
    %72 = vector.multi_reduction <add>, %69, %cst_21 [1] : vector<8x8xf32> to vector<8xf32>
    %73 = vector.shape_cast %72 : vector<8xf32> to vector<8x1xf32>
    %cst_22 = arith.constant 0.000000e+00 : f32
    %74 = vector.broadcast %cst_22 : f32 to vector<8x1xf32>
    %75 = arith.cmpf oeq, %71, %74 : vector<8x1xf32>
    %cst_23 = arith.constant 1.000000e+00 : f32
    %76 = vector.broadcast %cst_23 : f32 to vector<8x1xf32>
    %77 = arith.select %75, %76, %71 : vector<8x1xi1>, vector<8x1xf32>
    %cst_24 = arith.constant 0.000000e+00 : f32
    %78 = vector.broadcast %cst_24 : f32 to vector<8x1xf32>
    %79 = arith.cmpf oeq, %73, %78 : vector<8x1xf32>
    %cst_25 = arith.constant 1.000000e+00 : f32
    %80 = vector.broadcast %cst_25 : f32 to vector<8x1xf32>
    %81 = arith.select %79, %80, %73 : vector<8x1xi1>, vector<8x1xf32>
    %82 = vector.shape_cast %77 : vector<8x1xf32> to vector<8x1xf32>
    %83 = vector.broadcast %82 : vector<8x1xf32> to vector<8x8xf32>
    %84 = vector.shape_cast %81 : vector<8x1xf32> to vector<8x1xf32>
    %85 = vector.broadcast %84 : vector<8x1xf32> to vector<8x8xf32>
    %86 = arith.select %18, %83, %85 : vector<8x8xi1>, vector<8x8xf32>
    %87 = arith.divf %66, %86 : vector<8x8xf32>
    %88 = vector.extract_strided_slice %2 {offsets = [0, 128], sizes = [8, 256], strides = [1, 1]} : vector<8x384xf32> to vector<8x256xf32>
    %cst_26 = arith.constant dense<0.000000e+00> : vector<8x256xf32>
    %89 = tpu.matmul %87, %88, %cst_26 {dimension_numbers = #tpu.dot_dimension_numbers<[1], [0], [0], [1], [0, 0, 1, 1], [], []>} : vector<8x8xf32>, vector<8x256xf32>, vector<8x256xf32> -> vector<8x256xf32>
    %90 = tpu.iota {dimensions = array<i32: 0>} : vector<8x128xi32>
    %c2_i32_27 = arith.constant 2 : i32
    %91 = vector.broadcast %c2_i32_27 : i32 to vector<8x128xi32>
    %92 = arith.cmpi slt, %90, %91 : vector<8x128xi32>
    %93 = vector.extract_strided_slice %89 {offsets = [0, 0], sizes = [8, 128], strides = [1, 1]} : vector<8x256xf32> to vector<8x128xf32>
    %94 = vector.extract_strided_slice %89 {offsets = [0, 128], sizes = [8, 128], strides = [1, 1]} : vector<8x256xf32> to vector<8x128xf32>
    %95 = arith.select %92, %93, %94 : vector<8x128xi1>, vector<8x128xf32>
    %96 = vector.extract_strided_slice %2 {offsets = [0, 0], sizes = [8, 128], strides = [1, 1]} : vector<8x384xf32> to vector<8x128xf32>
    %97 = arith.addf %96, %95 : vector<8x128xf32>
    %cst_28 = arith.constant 0.000000e+00 : f32
    %98 = vector.broadcast %cst_28 : f32 to vector<8x128xf32>
    %99 = arith.maximumf %97, %98 : vector<8x128xf32>
    %c0_29 = arith.constant 0 : index
    %c0_30 = arith.constant 0 : index
    %100 = vector.load %arg3[%c0_29, %c0_30] : memref<8x128xf32, #tpu.memory_space<vmem>>, vector<8x128xf32>
    tpu.vector_store %arg3[%c0_29, %c0_30], %99 {strides = array<i32>} : memref<8x128xf32, #tpu.memory_space<vmem>>, vector<8x128xf32>,
    return
  }
}

</mosaic_0001>

<llo_original>
// kernel: tpu_custom_call.1
$region0: #{tpu_custom_call.1}
  #allocation0 [shape = 'u32[]', space=smem, size = 0x4, offset = 0x4, fixed_abs, tag = 'smem constant byte address 0x4 - core index']
  #allocation1 [shape = 'u32[144,128]{1,0:T(1,128)}', space=vmem, size = 0x12000, scoped, tag = 'internal scratch']
  %s0 = inlined_call_operand.hbm [shape: f32[8,128], index: 0, kind: input, shape index: {}]
  %s1 = inlined_call_operand.hbm [shape: f32[128,384], index: 1, kind: input, shape index: {}]
  %s2 = inlined_call_operand.hbm [shape: f32[16,384], index: 2, kind: input, shape index: {}]
  %s3 = inlined_call_operand.hbm [shape: f32[8,128], index: 3, kind: output, shape index: {}]
  %s4 = sld [smem:[#allocation0]]
  $region34: #{tpu_custom_call.1} parent=0
    _
  %s6 = ssub.s32 1, %s4
  %s7 = scalar_select 0, %s6, %s4
  $region1: #{tpu_custom_call.1} parent=0
    #allocation2 [shape = 'u8[4096]{0}', space=vmem, size = 0x1000, scoped, tag = 'input window, operand 0, single buffered']
    #allocation3 [shape = 's32[1]{0}', space=sflag, size = 0x4, scoped, tag = 'scoped memory for tpu_custom_call.1']
    #allocation4 [shape = 's32[1]{0}', space=sflag, size = 0x4, scoped, tag = 'scoped memory for tpu_custom_call.1']
    #allocation5 [shape = 'u8[196608]{0}', space=vmem, size = 0x30000, scoped, tag = 'input window, operand 1, single buffered']
    #allocation6 [shape = 's32[1]{0}', space=sflag, size = 0x4, scoped, tag = 'scoped memory for tpu_custom_call.1']
    #allocation7 [shape = 'u8[24576]{0}', space=vmem, size = 0x6000, scoped, tag = 'input window, operand 2, single buffered']
    #allocation8 [shape = 'u8[4096]{0}', space=vmem, size = 0x1000, scoped, tag = 'output window, operand 0, single buffered']
    %8 = vsyncpa [#allocation3], 0
    %9 = vsyncpa [#allocation6], 0
    %10 = vsyncpa [#allocation4], 0
    // Predicated region
    $region2: #{tpu_custom_call.1} parent=1 // pred_check
      _
    $region3: #{tpu_custom_call.1} parent=1 // pred_check_branch
      %12 = sbr.rel (0) target = $region5
    $region4: #{tpu_custom_call.1} parent=1 // pred_region
      %s14 = ssub.s32 128, 128
      %15 = vsyncadd [#allocation3], %s14
      %s17 = sshll.u32 [#allocation2], 4
      %s18 = int_to_ptr.vmem [resolvable:$true] %s17
      %20 = dma.hbm_to_vmem [thread:$0]  %s0, 128, %s18, [#allocation3]
    $region5: #{tpu_custom_call.1} parent=1 // pred_fallthru
      _
    // Predicated region
    $region6: #{tpu_custom_call.1} parent=1 // pred_check
      _
    $region7: #{tpu_custom_call.1} parent=1 // pred_check_branch
      %22 = sbr.rel (0) target = $region9
    $region8: #{tpu_custom_call.1} parent=1 // pred_region
      %s24 = ssub.s32 6144, 6144
      %25 = vsyncadd [#allocation6], %s24
      %s26 = sshll.u32 [#allocation5], 4
      %s27 = int_to_ptr.vmem [resolvable:$true] %s26
      %32 = dma.hbm_to_vmem [thread:$0]  %s1, 6144, %s27, [#allocation6], 384, 384, 24
    $region9: #{tpu_custom_call.1} parent=1 // pred_fallthru
      _
    // Predicated region
    $region10: #{tpu_custom_call.1} parent=1 // pred_check
      _
    $region11: #{tpu_custom_call.1} parent=1 // pred_check_branch
      %34 = sbr.rel (0) target = $region13
    $region12: #{tpu_custom_call.1} parent=1 // pred_region
      %s36 = ssub.s32 768, 768
      %37 = vsyncadd [#allocation6], %s36
      %s38 = sshll.u32 [#allocation7], 4
      %s39 = int_to_ptr.vmem [resolvable:$true] %s38
      %44 = dma.hbm_to_vmem [thread:$0]  %s2, 768, %s39, [#allocation6], 384, 384, 24
    $region13: #{tpu_custom_call.1} parent=1 // pred_fallthru
      _
    // Predicated region
    $region14: #{tpu_custom_call.1} parent=1 // pred_check
      _
    $region15: #{tpu_custom_call.1} parent=1 // pred_check_branch
      %46 = sbr.rel (0) target = $region17
    $region16: #{tpu_custom_call.1} parent=1 // pred_region
      %47 = dma.done [#allocation3], 128
    $region17: #{tpu_custom_call.1} parent=1 // pred_fallthru
      _
    // Predicated region
    $region18: #{tpu_custom_call.1} parent=1 // pred_check
      _
    $region19: #{tpu_custom_call.1} parent=1 // pred_check_branch
      %49 = sbr.rel (0) target = $region21
    $region20: #{tpu_custom_call.1} parent=1 // pred_region
      %50 = dma.done [#allocation6], 6144
    $region21: #{tpu_custom_call.1} parent=1 // pred_fallthru
      _
    // Predicated region
    $region22: #{tpu_custom_call.1} parent=1 // pred_check
      _
    $region23: #{tpu_custom_call.1} parent=1 // pred_check_branch
      %52 = sbr.rel (0) target = $region25
    $region24: #{tpu_custom_call.1} parent=1 // pred_region
      %53 = dma.done [#allocation6], 768
    $region25: #{tpu_custom_call.1} parent=1 // pred_fallthru
      _
    %v54 = vld [vmem:[#allocation2] sm:$0xff]
    %v55 = vld [vmem:[#allocation5] sm:$0xff]
    %v56 = vld [vmem:[#allocation5 + $0x8] sm:$0xff]
    %v57 = vld [vmem:[#allocation5 + $0x10] sm:$0xff]
    %v58 = vld [vmem:[#allocation5 + $0x18] sm:$0xff]
    %v59 = vld [vmem:[#allocation5 + $0x20] sm:$0xff]
    %v60 = vld [vmem:[#allocation5 + $0x28] sm:$0xff]
    %v61 = vld [vmem:[#allocation5 + $0x30] sm:$0xff]
    %v62 = vld [vmem:[#allocation5 + $0x38] sm:$0xff]
    %v63 = vld [vmem:[#allocation5 + $0x40] sm:$0xff]
    %v64 = vld [vmem:[#allocation5 + $0x48] sm:$0xff]
    %v65 = vld [vmem:[#allocation5 + $0x50] sm:$0xff]
    %v66 = vld [vmem:[#allocation5 + $0x58] sm:$0xff]
    %v67 = vld [vmem:[#allocation5 + $0x60] sm:$0xff]
    %v68 = vld [vmem:[#allocation5 + $0x68] sm:$0xff]
    %v69 = vld [vmem:[#allocation5 + $0x70] sm:$0xff]
    %v70 = vld [vmem:[#allocation5 + $0x78] sm:$0xff]
    %v71 = vld [vmem:[#allocation5 + $0x80] sm:$0xff]
    %v72 = vld [vmem:[#allocation5 + $0x88] sm:$0xff]
    %v73 = vld [vmem:[#allocation5 + $0x90] sm:$0xff]
    %v74 = vld [vmem:[#allocation5 + $0x98] sm:$0xff]
    %v75 = vld [vmem:[#allocation5 + $0xa0] sm:$0xff]
    %v76 = vld [vmem:[#allocation5 + $0xa8] sm:$0xff]
    %v77 = vld [vmem:[#allocation5 + $0xb0] sm:$0xff]
    %v78 = vld [vmem:[#allocation5 + $0xb8] sm:$0xff]
    %v79 = vld [vmem:[#allocation5 + $0xc0] sm:$0xff]
    %v80 = vld [vmem:[#allocation5 + $0xc8] sm:$0xff]
    %v81 = vld [vmem:[#allocation5 + $0xd0] sm:$0xff]
    %v82 = vld [vmem:[#allocation5 + $0xd8] sm:$0xff]
    %v83 = vld [vmem:[#allocation5 + $0xe0] sm:$0xff]
    %v84 = vld [vmem:[#allocation5 + $0xe8] sm:$0xff]
    %v85 = vld [vmem:[#allocation5 + $0xf0] sm:$0xff]
    %v86 = vld [vmem:[#allocation5 + $0xf8] sm:$0xff]
    %v87 = vld [vmem:[#allocation5 + $0x100] sm:$0xff]
    %v88 = vld [vmem:[#allocation5 + $0x108] sm:$0xff]
    %v89 = vld [vmem:[#allocation5 + $0x110] sm:$0xff]
    %v90 = vld [vmem:[#allocation5 + $0x118] sm:$0xff]
    %v91 = vld [vmem:[#allocation5 + $0x120] sm:$0xff]
    %v92 = vld [vmem:[#allocation5 + $0x128] sm:$0xff]
    %v93 = vld [vmem:[#allocation5 + $0x130] sm:$0xff]
    %v94 = vld [vmem:[#allocation5 + $0x138] sm:$0xff]
    %v95 = vld [vmem:[#allocation5 + $0x140] sm:$0xff]
    %v96 = vld [vmem:[#allocation5 + $0x148] sm:$0xff]
    %v97 = vld [vmem:[#allocation5 + $0x150] sm:$0xff]
    %v98 = vld [vmem:[#allocation5 + $0x158] sm:$0xff]
    %v99 = vld [vmem:[#allocation5 + $0x160] sm:$0xff]
    %v100 = vld [vmem:[#allocation5 + $0x168] sm:$0xff]
    %v101 = vld [vmem:[#allocation5 + $0x170] sm:$0xff]
    %v102 = vld [vmem:[#allocation5 + $0x178] sm:$0xff]
    %103 = vmatprep.subr.mxu0 %v56
    %104 = vmatpush1.msra.mxu0 %v55
    %105 = vmatprep.subr.mxu0 %v59
    %106 = vmatpush1.msra.mxu0 %v58
    %107 = vmatprep.subr.mxu0 %v62
    %108 = vmatpush1.msra.mxu0 %v61
    %109 = vmatprep.subr.mxu0 %v65
    %110 = vmatpush1.msra.mxu0 %v64
    %111 = vmatprep.subr.mxu0 %v68
    %112 = vmatpush1.msra.mxu0 %v67
    %113 = vmatprep.subr.mxu0 %v71
    %114 = vmatpush1.msra.mxu0 %v70
    %115 = vmatprep.subr.mxu0 %v74
    %116 = vmatpush1.msra.mxu0 %v73
    %117 = vmatprep.subr.mxu0 %v77
    %118 = vmatpush1.msra.mxu0 %v76
    %119 = vmatprep.subr.mxu0 %v80
    %120 = vmatpush1.msra.mxu0 %v79
    %121 = vmatprep.subr.mxu0 %v83
    %122 = vmatpush1.msra.mxu0 %v82
    %123 = vmatprep.subr.mxu0 %v86
    %124 = vmatpush1.msra.mxu0 %v85
    %125 = vmatprep.subr.mxu0 %v89
    %126 = vmatpush1.msra.mxu0 %v88
    %127 = vmatprep.subr.mxu0 %v92
    %128 = vmatpush1.msra.mxu0 %v91
    %129 = vmatprep.subr.mxu0 %v95
    %130 = vmatpush1.msra.mxu0 %v94
    %131 = vmatprep.subr.mxu0 %v98
    %132 = vmatpush1.msra.mxu0 %v97
    %133 = vmatprep.subr.mxu0 %v101
    %134 = vmatpush1.msra.mxu0 %v100
    %135 = vmatprep.subr.mxu0 0.0
    %136 = vmatpush1.msra.mxu0 0.0
    %137 = vmatprep.subr.mxu0 0.0
    %138 = vmatpush1.msra.mxu0 0.0
    %139 = vmatprep.subr.mxu0 0.0
    %140 = vmatpush1.msra.mxu0 0.0
    %141 = vmatprep.subr.mxu0 0.0
    %142 = vmatpush1.msra.mxu0 0.0
    %143 = vmatprep.subr.mxu0 0.0
    %144 = vmatpush1.msra.mxu0 0.0
    %145 = vmatprep.subr.mxu0 0.0
    %146 = vmatpush1.msra.mxu0 0.0
    %147 = vmatprep.subr.mxu0 0.0
    %148 = vmatpush1.msra.mxu0 0.0
    %149 = vmatprep.subr.mxu0 0.0
    %150 = vmatpush1.msra.mxu0 0.0
    %151 = vmatprep.subr.mxu0 0.0
    %152 = vmatpush1.msra.mxu0 0.0
    %153 = vmatprep.subr.mxu0 0.0
    %154 = vmatpush1.msra.mxu0 0.0
    %155 = vmatprep.subr.mxu0 0.0
    %156 = vmatpush1.msra.mxu0 0.0
    %157 = vmatprep.subr.mxu0 0.0
    %158 = vmatpush1.msra.mxu0 0.0
    %159 = vmatprep.subr.mxu0 0.0
    %160 = vmatpush1.msra.mxu0 0.0
    %161 = vmatprep.subr.mxu0 0.0
    %162 = vmatpush1.msra.mxu0 0.0
    %163 = vmatprep.subr.mxu0 0.0
    %164 = vmatpush1.msra.mxu0 0.0
    %165 = vmatprep.subr.mxu0 0.0
    %166 = vmatpush1.msra.mxu0 0.0
    %167 = vmatprep.mubr.f32.mxu0 0.0
    %168 = vmatmul.mubr.f32.gmra.mrb[0].mxu0 %v54
    %v169 = vpop.f32.mrb[0].mxu0
    %v170 = vadd.f32 0.0, %v169
    %v171 = vpop.f32.mrb[0].mxu0
    %v172 = vadd.f32 0.0, %v171
    %173 = vdwg.mxu0
    %174 = vmatprep.subr.mxu0 0.0
    %175 = vmatpush1.msra.mxu0 %v57
    %176 = vmatprep.subr.mxu0 0.0
    %177 = vmatpush1.msra.mxu0 %v60
    %178 = vmatprep.subr.mxu0 0.0
    %179 = vmatpush1.msra.mxu0 %v63
    %180 = vmatprep.subr.mxu0 0.0
    %181 = vmatpush1.msra.mxu0 %v66
    %182 = vmatprep.subr.mxu0 0.0
    %183 = vmatpush1.msra.mxu0 %v69
    %184 = vmatprep.subr.mxu0 0.0
    %185 = vmatpush1.msra.mxu0 %v72
    %186 = vmatprep.subr.mxu0 0.0
    %187 = vmatpush1.msra.mxu0 %v75
    %188 = vmatprep.subr.mxu0 0.0
    %189 = vmatpush1.msra.mxu0 %v78
    %190 = vmatprep.subr.mxu0 0.0
    %191 = vmatpush1.msra.mxu0 %v81
    %192 = vmatprep.subr.mxu0 0.0
    %193 = vmatpush1.msra.mxu0 %v84
    %194 = vmatprep.subr.mxu0 0.0
    %195 = vmatpush1.msra.mxu0 %v87
    %196 = vmatprep.subr.mxu0 0.0
    %197 = vmatpush1.msra.mxu0 %v90
    %198 = vmatprep.subr.mxu0 0.0
    %199 = vmatpush1.msra.mxu0 %v93
    %200 = vmatprep.subr.mxu0 0.0
    %201 = vmatpush1.msra.mxu0 %v96
    %202 = vmatprep.subr.mxu0 0.0
    %203 = vmatpush1.msra.mxu0 %v99
    %204 = vmatprep.subr.mxu0 0.0
    %205 = vmatpush1.msra.mxu0 %v102
    %206 = vmatprep.subr.mxu0 0.0
    %207 = vmatpush1.msra.mxu0 0.0
    %208 = vmatprep.subr.mxu0 0.0
    %209 = vmatpush1.msra.mxu0 0.0
    %210 = vmatprep.subr.mxu0 0.0
    %211 = vmatpush1.msra.mxu0 0.0
    %212 = vmatprep.subr.mxu0 0.0
    %213 = vmatpush1.msra.mxu0 0.0
    %214 = vmatprep.subr.mxu0 0.0
    %215 = vmatpush1.msra.mxu0 0.0
    %216 = vmatprep.subr.mxu0 0.0
    %217 = vmatpush1.msra.mxu0 0.0
    %218 = vmatprep.subr.mxu0 0.0
    %219 = vmatpush1.msra.mxu0 0.0
    %220 = vmatprep.subr.mxu0 0.0
    %221 = vmatpush1.msra.mxu0 0.0
    %222 = vmatprep.subr.mxu0 0.0
    %223 = vmatpush1.msra.mxu0 0.0
    %224 = vmatprep.subr.mxu0 0.0
    %225 = vmatpush1.msra.mxu0 0.0
    %226 = vmatprep.subr.mxu0 0.0
    %227 = vmatpush1.msra.mxu0 0.0
    %228 = vmatprep.subr.mxu0 0.0
    %229 = vmatpush1.msra.mxu0 0.0
    %230 = vmatprep.subr.mxu0 0.0
    %231 = vmatpush1.msra.mxu0 0.0
    %232 = vmatprep.subr.mxu0 0.0
    %233 = vmatpush1.msra.mxu0 0.0
    %234 = vmatprep.subr.mxu0 0.0
    %235 = vmatpush1.msra.mxu0 0.0
    %236 = vmatprep.subr.mxu0 0.0
    %237 = vmatpush1.msra.mxu0 0.0
    %238 = vmatprep.mubr.f32.mxu0 0.0
    %239 = vmatmul.mubr.f32.gmra.mrb[0].mxu0 %v54
    %v240 = vpop.f32.mrb[0].mxu0
    %v241 = vadd.f32 0.0, %v240
    %v242 = vpop.f32.mrb[0].mxu0
    %243 = vdwg.mxu0
    %v244 = vld [vmem:[#allocation7] sm:$0xff]
    %v245 = vld [vmem:[#allocation7 + $0x8] sm:$0xff]
    %v246 = vld [vmem:[#allocation7 + $0x10] sm:$0xff]
    %v247 = vld [vmem:[#allocation7 + $0x18] sm:$0xff]
    %248 = vmatprep.subr.mxu0 %v245
    %249 = vmatpush1.xpose.msra.mxu0 %v244
    %250 = vmatprep.subr.mxu0 0.0
    %251 = vmatpush1.xpose.msra.mxu0 0.0
    %252 = vmatprep.subr.mxu0 0.0
    %253 = vmatpush1.xpose.msra.mxu0 0.0
    %254 = vmatprep.subr.mxu0 0.0
    %255 = vmatpush1.xpose.msra.mxu0 0.0
    %256 = vmatprep.subr.mxu0 0.0
    %257 = vmatpush1.xpose.msra.mxu0 0.0
    %258 = vmatprep.subr.mxu0 0.0
    %259 = vmatpush1.xpose.msra.mxu0 0.0
    %260 = vmatprep.subr.mxu0 0.0
    %261 = vmatpush1.xpose.msra.mxu0 0.0
    %262 = vmatprep.subr.mxu0 0.0
    %263 = vmatpush1.xpose.msra.mxu0 0.0
    %264 = vmatprep.subr.mxu0 0.0
    %265 = vmatpush1.xpose.msra.mxu0 0.0
    %266 = vmatprep.subr.mxu0 0.0
    %267 = vmatpush1.xpose.msra.mxu0 0.0
    %268 = vmatprep.subr.mxu0 0.0
    %269 = vmatpush1.xpose.msra.mxu0 0.0
    %270 = vmatprep.subr.mxu0 0.0
    %271 = vmatpush1.xpose.msra.mxu0 0.0
    %272 = vmatprep.subr.mxu0 0.0
    %273 = vmatpush1.xpose.msra.mxu0 0.0
    %274 = vmatprep.subr.mxu0 0.0
    %275 = vmatpush1.xpose.msra.mxu0 0.0
    %276 = vmatprep.subr.mxu0 0.0
    %277 = vmatpush1.xpose.msra.mxu0 0.0
    %278 = vmatprep.subr.mxu0 0.0
    %279 = vmatpush1.xpose.msra.mxu0 0.0
    %280 = vmatprep.subr.mxu0 0.0
    %281 = vmatpush1.xpose.msra.mxu0 0.0
    %282 = vmatprep.subr.mxu0 0.0
    %283 = vmatpush1.xpose.msra.mxu0 0.0
    %284 = vmatprep.subr.mxu0 0.0
    %285 = vmatpush1.xpose.msra.mxu0 0.0
    %286 = vmatprep.subr.mxu0 0.0
    %287 = vmatpush1.xpose.msra.mxu0 0.0
    %288 = vmatprep.subr.mxu0 0.0
    %289 = vmatpush1.xpose.msra.mxu0 0.0
    %290 = vmatprep.subr.mxu0 0.0
    %291 = vmatpush1.xpose.msra.mxu0 0.0
    %292 = vmatprep.subr.mxu0 0.0
    %293 = vmatpush1.xpose.msra.mxu0 0.0
    %294 = vmatprep.subr.mxu0 0.0
    %295 = vmatpush1.xpose.msra.mxu0 0.0
    %296 = vmatprep.subr.mxu0 0.0
    %297 = vmatpush1.xpose.msra.mxu0 0.0
    %298 = vmatprep.subr.mxu0 0.0
    %299 = vmatpush1.xpose.msra.mxu0 0.0
    %300 = vmatprep.subr.mxu0 0.0
    %301 = vmatpush1.xpose.msra.mxu0 0.0
    %302 = vmatprep.subr.mxu0 0.0
    %303 = vmatpush1.xpose.msra.mxu0 0.0
    %304 = vmatprep.subr.mxu0 0.0
    %305 = vmatpush1.xpose.msra.mxu0 0.0
    %306 = vmatprep.subr.mxu0 0.0
    %307 = vmatpush1.xpose.msra.mxu0 0.0
    %308 = vmatprep.subr.mxu0 0.0
    %309 = vmatpush1.xpose.msra.mxu0 0.0
    %310 = vmatprep.subr.mxu0 0.0
    %311 = vmatpush1.xpose.msra.mxu0 0.0
    %312 = vmatprep.mubr.f32.mxu0 %v172
    %313 = vmatmul.mubr.f32.gmra.mrb[0].mxu0 %v170
    %v314 = vpop.f32.mrb[0].mxu0
    %v315 = vadd.f32 0.0, %v314
    %v316 = vpop.f32.mrb[0].mxu0
    %317 = vdwg.mxu0
    %318 = vmatprep.subr.mxu0 0.0
    %319 = vmatpush1.xpose.msra.mxu0 %v246
    %320 = vmatprep.subr.mxu0 0.0
    %321 = vmatpush1.xpose.msra.mxu0 0.0
    %322 = vmatprep.subr.mxu0 0.0
    %323 = vmatpush1.xpose.msra.mxu0 0.0
    %324 = vmatprep.subr.mxu0 0.0
    %325 = vmatpush1.xpose.msra.mxu0 0.0
    %326 = vmatprep.subr.mxu0 0.0
    %327 = vmatpush1.xpose.msra.mxu0 0.0
    %328 = vmatprep.subr.mxu0 0.0
    %329 = vmatpush1.xpose.msra.mxu0 0.0
    %330 = vmatprep.subr.mxu0 0.0
    %331 = vmatpush1.xpose.msra.mxu0 0.0
    %332 = vmatprep.subr.mxu0 0.0
    %333 = vmatpush1.xpose.msra.mxu0 0.0
    %334 = vmatprep.subr.mxu0 0.0
    %335 = vmatpush1.xpose.msra.mxu0 0.0
    %336 = vmatprep.subr.mxu0 0.0
    %337 = vmatpush1.xpose.msra.mxu0 0.0
    %338 = vmatprep.subr.mxu0 0.0
    %339 = vmatpush1.xpose.msra.mxu0 0.0
    %340 = vmatprep.subr.mxu0 0.0
    %341 = vmatpush1.xpose.msra.mxu0 0.0
    %342 = vmatprep.subr.mxu0 0.0
    %343 = vmatpush1.xpose.msra.mxu0 0.0
    %344 = vmatprep.subr.mxu0 0.0
    %345 = vmatpush1.xpose.msra.mxu0 0.0
    %346 = vmatprep.subr.mxu0 0.0
    %347 = vmatpush1.xpose.msra.mxu0 0.0
    %348 = vmatprep.subr.mxu0 0.0
    %349 = vmatpush1.xpose.msra.mxu0 0.0
    %350 = vmatprep.subr.mxu0 0.0
    %351 = vmatpush1.xpose.msra.mxu0 0.0
    %352 = vmatprep.subr.mxu0 0.0
    %353 = vmatpush1.xpose.msra.mxu0 0.0
    %354 = vmatprep.subr.mxu0 0.0
    %355 = vmatpush1.xpose.msra.mxu0 0.0
    %356 = vmatprep.subr.mxu0 0.0
    %357 = vmatpush1.xpose.msra.mxu0 0.0
    %358 = vmatprep.subr.mxu0 0.0
    %359 = vmatpush1.xpose.msra.mxu0 0.0
    %360 = vmatprep.subr.mxu0 0.0
    %361 = vmatpush1.xpose.msra.mxu0 0.0
    %362 = vmatprep.subr.mxu0 0.0
    %363 = vmatpush1.xpose.msra.mxu0 0.0
    %364 = vmatprep.subr.mxu0 0.0
    %365 = vmatpush1.xpose.msra.mxu0 0.0
    %366 = vmatprep.subr.mxu0 0.0
    %367 = vmatpush1.xpose.msra.mxu0 0.0
    %368 = vmatprep.subr.mxu0 0.0
    %369 = vmatpush1.xpose.msra.mxu0 0.0
    %370 = vmatprep.subr.mxu0 0.0
    %371 = vmatpush1.xpose.msra.mxu0 0.0
    %372 = vmatprep.subr.mxu0 0.0
    %373 = vmatpush1.xpose.msra.mxu0 0.0
    %374 = vmatprep.subr.mxu0 0.0
    %375 = vmatpush1.xpose.msra.mxu0 0.0
    %376 = vmatprep.subr.mxu0 0.0
    %377 = vmatpush1.xpose.msra.mxu0 0.0
    %378 = vmatprep.subr.mxu0 0.0
    %379 = vmatpush1.xpose.msra.mxu0 0.0
    %380 = vmatprep.subr.mxu0 0.0
    %381 = vmatpush1.xpose.msra.mxu0 0.0
    %382 = vmatprep.mubr.f32.mxu0 0.0
    %383 = vmatmul.mubr.f32.gmra.mrb[0].mxu0 %v241
    %v384 = vpop.f32.mrb[0].mxu0
    %v385 = vadd.f32 %v315, %v384
    %v386 = vpop.f32.mrb[0].mxu0
    %387 = vdwg.mxu0
    %388 = vmatprep.subr.mxu0 %v172
    %389 = vmatpush1.xpose.msra.mxu0 %v170
    %390 = vmatprep.subr.mxu0 0.0
    %391 = vmatpush1.xpose.msra.mxu0 0.0
    %392 = vmatprep.subr.mxu0 0.0
    %393 = vmatpush1.xpose.msra.mxu0 0.0
    %394 = vmatprep.subr.mxu0 0.0
    %395 = vmatpush1.xpose.msra.mxu0 0.0
    %396 = vmatprep.subr.mxu0 0.0
    %397 = vmatpush1.xpose.msra.mxu0 0.0
    %398 = vmatprep.subr.mxu0 0.0
    %399 = vmatpush1.xpose.msra.mxu0 0.0
    %400 = vmatprep.subr.mxu0 0.0
    %401 = vmatpush1.xpose.msra.mxu0 0.0
    %402 = vmatprep.subr.mxu0 0.0
    %403 = vmatpush1.xpose.msra.mxu0 0.0
    %404 = vmatprep.subr.mxu0 0.0
    %405 = vmatpush1.xpose.msra.mxu0 0.0
    %406 = vmatprep.subr.mxu0 0.0
    %407 = vmatpush1.xpose.msra.mxu0 0.0
    %408 = vmatprep.subr.mxu0 0.0
    %409 = vmatpush1.xpose.msra.mxu0 0.0
    %410 = vmatprep.subr.mxu0 0.0
    %411 = vmatpush1.xpose.msra.mxu0 0.0
    %412 = vmatprep.subr.mxu0 0.0
    %413 = vmatpush1.xpose.msra.mxu0 0.0
    %414 = vmatprep.subr.mxu0 0.0
    %415 = vmatpush1.xpose.msra.mxu0 0.0
    %416 = vmatprep.subr.mxu0 0.0
    %417 = vmatpush1.xpose.msra.mxu0 0.0
    %418 = vmatprep.subr.mxu0 0.0
    %419 = vmatpush1.xpose.msra.mxu0 0.0
    %420 = vmatprep.subr.mxu0 0.0
    %421 = vmatpush1.xpose.msra.mxu0 0.0
    %422 = vmatprep.subr.mxu0 0.0
    %423 = vmatpush1.xpose.msra.mxu0 0.0
    %424 = vmatprep.subr.mxu0 0.0
    %425 = vmatpush1.xpose.msra.mxu0 0.0
    %426 = vmatprep.subr.mxu0 0.0
    %427 = vmatpush1.xpose.msra.mxu0 0.0
    %428 = vmatprep.subr.mxu0 0.0
    %429 = vmatpush1.xpose.msra.mxu0 0.0
    %430 = vmatprep.subr.mxu0 0.0
    %431 = vmatpush1.xpose.msra.mxu0 0.0
    %432 = vmatprep.subr.mxu0 0.0
    %433 = vmatpush1.xpose.msra.mxu0 0.0
    %434 = vmatprep.subr.mxu0 0.0
    %435 = vmatpush1.xpose.msra.mxu0 0.0
    %436 = vmatprep.subr.mxu0 0.0
    %437 = vmatpush1.xpose.msra.mxu0 0.0
    %438 = vmatprep.subr.mxu0 0.0
    %439 = vmatpush1.xpose.msra.mxu0 0.0
    %440 = vmatprep.subr.mxu0 0.0
    %441 = vmatpush1.xpose.msra.mxu0 0.0
    %442 = vmatprep.subr.mxu0 0.0
    %443 = vmatpush1.xpose.msra.mxu0 0.0
    %444 = vmatprep.subr.mxu0 0.0
    %445 = vmatpush1.xpose.msra.mxu0 0.0
    %446 = vmatprep.subr.mxu0 0.0
    %447 = vmatpush1.xpose.msra.mxu0 0.0
    %448 = vmatprep.subr.mxu0 0.0
    %449 = vmatpush1.xpose.msra.mxu0 0.0
    %450 = vmatprep.subr.mxu0 0.0
    %451 = vmatpush1.xpose.msra.mxu0 0.0
    %452 = vmatprep.mubr.f32.mxu0 %v245
    %453 = vmatmul.mubr.f32.gmra.mrb[0].mxu0 %v244
    %v454 = vpop.f32.mrb[0].mxu0
    %v455 = vadd.f32 0.0, %v454
    %v456 = vpop.f32.mrb[0].mxu0
    %457 = vdwg.mxu0
    %458 = vmatprep.subr.mxu0 0.0
    %459 = vmatpush1.xpose.msra.mxu0 %v241
    %460 = vmatprep.subr.mxu0 0.0
    %461 = vmatpush1.xpose.msra.mxu0 0.0
    %462 = vmatprep.subr.mxu0 0.0
    %463 = vmatpush1.xpose.msra.mxu0 0.0
    %464 = vmatprep.subr.mxu0 0.0
    %465 = vmatpush1.xpose.msra.mxu0 0.0
    %466 = vmatprep.subr.mxu0 0.0
    %467 = vmatpush1.xpose.msra.mxu0 0.0
    %468 = vmatprep.subr.mxu0 0.0
    %469 = vmatpush1.xpose.msra.mxu0 0.0
    %470 = vmatprep.subr.mxu0 0.0
    %471 = vmatpush1.xpose.msra.mxu0 0.0
    %472 = vmatprep.subr.mxu0 0.0
    %473 = vmatpush1.xpose.msra.mxu0 0.0
    %474 = vmatprep.subr.mxu0 0.0
    %475 = vmatpush1.xpose.msra.mxu0 0.0
    %476 = vmatprep.subr.mxu0 0.0
    %477 = vmatpush1.xpose.msra.mxu0 0.0
    %478 = vmatprep.subr.mxu0 0.0
    %479 = vmatpush1.xpose.msra.mxu0 0.0
    %480 = vmatprep.subr.mxu0 0.0
    %481 = vmatpush1.xpose.msra.mxu0 0.0
    %482 = vmatprep.subr.mxu0 0.0
    %483 = vmatpush1.xpose.msra.mxu0 0.0
    %484 = vmatprep.subr.mxu0 0.0
    %485 = vmatpush1.xpose.msra.mxu0 0.0
    %486 = vmatprep.subr.mxu0 0.0
    %487 = vmatpush1.xpose.msra.mxu0 0.0
    %488 = vmatprep.subr.mxu0 0.0
    %489 = vmatpush1.xpose.msra.mxu0 0.0
    %490 = vmatprep.subr.mxu0 0.0
    %491 = vmatpush1.xpose.msra.mxu0 0.0
    %492 = vmatprep.subr.mxu0 0.0
    %493 = vmatpush1.xpose.msra.mxu0 0.0
    %494 = vmatprep.subr.mxu0 0.0
    %495 = vmatpush1.xpose.msra.mxu0 0.0
    %496 = vmatprep.subr.mxu0 0.0
    %497 = vmatpush1.xpose.msra.mxu0 0.0
    %498 = vmatprep.subr.mxu0 0.0
    %499 = vmatpush1.xpose.msra.mxu0 0.0
    %500 = vmatprep.subr.mxu0 0.0
    %501 = vmatpush1.xpose.msra.mxu0 0.0
    %502 = vmatprep.subr.mxu0 0.0
    %503 = vmatpush1.xpose.msra.mxu0 0.0
    %504 = vmatprep.subr.mxu0 0.0
    %505 = vmatpush1.xpose.msra.mxu0 0.0
    %506 = vmatprep.subr.mxu0 0.0
    %507 = vmatpush1.xpose.msra.mxu0 0.0
    %508 = vmatprep.subr.mxu0 0.0
    %509 = vmatpush1.xpose.msra.mxu0 0.0
    %510 = vmatprep.subr.mxu0 0.0
    %511 = vmatpush1.xpose.msra.mxu0 0.0
    %512 = vmatprep.subr.mxu0 0.0
    %513 = vmatpush1.xpose.msra.mxu0 0.0
    %514 = vmatprep.subr.mxu0 0.0
    %515 = vmatpush1.xpose.msra.mxu0 0.0
    %516 = vmatprep.subr.mxu0 0.0
    %517 = vmatpush1.xpose.msra.mxu0 0.0
    %518 = vmatprep.subr.mxu0 0.0
    %519 = vmatpush1.xpose.msra.mxu0 0.0
    %520 = vmatprep.subr.mxu0 0.0
    %521 = vmatpush1.xpose.msra.mxu0 0.0
    %522 = vmatprep.mubr.f32.mxu0 0.0
    %523 = vmatmul.mubr.f32.gmra.mrb[0].mxu0 %v246
    %v524 = vpop.f32.mrb[0].mxu0
    %v525 = vadd.f32 %v455, %v524
    %v526 = vpop.f32.mrb[0].mxu0
    %527 = vdwg.mxu0
    %v528 = vlaneseq
    %v529 = vshrl.u32 %v528, 7
    %vm530 = vcmp.lt.s32.totalorder %v529, 2
    %v531 = vlaneseq
    %v532 = vand.u32 %v531, 127
    %vm533 = vcmp.lt.s32.totalorder %v532, 2
    %535 = vrot.lane.b32.xlu0 %v385, 126
    %v536 = vpop.permute.xlu0 %535
    %v538 = vsel %vm530, %v385, %v536
    %v540 = vrot.slane %v525, 1
    %v542 = vsel %vm533, %v525, %v540
    %544 = vset.pattern.permute.xlu0 0
    %545 = vperm.xlu0 %544, %v538
    %v546 = vpop.permute.xlu0 %545
    %548 = vset.pattern.permute.xlu0 1
    %549 = vperm.xlu0 %548, %v538
    %v550 = vpop.permute.xlu0 %549
    %v552 = vsel %vm533, %v546, %v550
    %v553 = vlaneseq
    %v554 = vshrl.u32 %v553, 7
    %v555 = vsub.s32 4, %v554
    %v556 = vrot.slane %v542, %v555
    %v557 = vlaneseq
    %v558 = vshrl.u32 %v557, 7
    %v559 = vsub.s32 6, %v558
    %v560 = vrot.slane %v542, %v559
    %v561 = vsel %vm530, %v556, %v560
    %v562 = vadd.f32 %v552, %v561
    %vm563 = vcmp.gt.f32.partialorder %v562, 0.0
    %v564 = vmul.f32 %v562, 0.2
    %v565 = vsel %vm563, %v562, %v564
    %vm566 = vcmp.gt.f32.partialorder %v247, 0.0
    %v567 = vsel %vm566, %v565, -1e+30
    %v568 = vsel %vm533, %v567, -1e+30
    %v569 = vsel %vm533, -1e+30, %v567
    %vm570 = vcmask 64512
    %v571 = vsel %vm570, %v568, -inf
    %572 = vmax.xlane.f32.xlu0 %v571
    %v573 = vpop.xlane.xlu0 %572
    %v574 = vsel %vm570, %v569, -inf
    %575 = vmax.xlane.f32.xlu0 %v574
    %v576 = vpop.xlane.xlu0 %575
    %v577 = vsel %vm533, %v573, %v576
    %v578 = vsub.f32 %v567, %v577
    %v579 = vmul.f32 %v578, 1.442695
    %v580 = vpow.pop %v579
    %v581 = vmul.f32 %v580, %v247
    %v582 = vsel %vm533, %v581, 0.0
    %v583 = vsub.f32 %v581, %v582
    %v584 = vsel %vm570, %v582, 0.0
    %585 = vadd.xlane.f32.xlu0 %v584
    %v586 = vpop.xlane.xlu0 %585
    %v587 = vsel %vm570, %v583, 0.0
    %588 = vadd.xlane.f32.xlu0 %v587
    %v589 = vpop.xlane.xlu0 %588
    %vm590 = vcmp.eq.f32.partialorder %v586, 0.0
    %v591 = vsel %vm590, 1.0, %v586
    %vm592 = vcmp.eq.f32.partialorder %v589, 0.0
    %v593 = vsel %vm592, 1.0, %v589
    %v594 = vsel %vm533, %v591, %v593
    %v595 = vrcp.pop %v594
    %v596 = vmul.f32 %v581, %v595
    %v598 = vsel %vm570, %v596, 0
    %600 = vmatprep.subr.mxu0 %v241
    %601 = vmatpush1.msra.mxu0 %v172
    %602 = vmatprep.subr.mxu0 0.0
    %603 = vmatpush1.msra.mxu0 0.0
    %604 = vmatprep.subr.mxu0 0.0
    %605 = vmatpush1.msra.mxu0 0.0
    %606 = vmatprep.subr.mxu0 0.0
    %607 = vmatpush1.msra.mxu0 0.0
    %608 = vmatprep.subr.mxu0 0.0
    %609 = vmatpush1.msra.mxu0 0.0
    %610 = vmatprep.subr.mxu0 0.0
    %611 = vmatpush1.msra.mxu0 0.0
    %612 = vmatprep.subr.mxu0 0.0
    %613 = vmatpush1.msra.mxu0 0.0
    %614 = vmatprep.subr.mxu0 0.0
    %615 = vmatpush1.msra.mxu0 0.0
    %616 = vmatprep.subr.mxu0 0.0
    %617 = vmatpush1.msra.mxu0 0.0
    %618 = vmatprep.subr.mxu0 0.0
    %619 = vmatpush1.msra.mxu0 0.0
    %620 = vmatprep.subr.mxu0 0.0
    %621 = vmatpush1.msra.mxu0 0.0
    %622 = vmatprep.subr.mxu0 0.0
    %623 = vmatpush1.msra.mxu0 0.0
    %624 = vmatprep.subr.mxu0 0.0
    %625 = vmatpush1.msra.mxu0 0.0
    %626 = vmatprep.subr.mxu0 0.0
    %627 = vmatpush1.msra.mxu0 0.0
    %628 = vmatprep.subr.mxu0 0.0
    %629 = vmatpush1.msra.mxu0 0.0
    %630 = vmatprep.subr.mxu0 0.0
    %631 = vmatpush1.msra.mxu0 0.0
    %632 = vmatprep.subr.mxu0 0.0
    %633 = vmatpush1.msra.mxu0 0.0
    %634 = vmatprep.subr.mxu0 0.0
    %635 = vmatpush1.msra.mxu0 0.0
    %636 = vmatprep.subr.mxu0 0.0
    %637 = vmatpush1.msra.mxu0 0.0
    %638 = vmatprep.subr.mxu0 0.0
    %639 = vmatpush1.msra.mxu0 0.0
    %640 = vmatprep.subr.mxu0 0.0
    %641 = vmatpush1.msra.mxu0 0.0
    %642 = vmatprep.subr.mxu0 0.0
    %643 = vmatpush1.msra.mxu0 0.0
    %644 = vmatprep.subr.mxu0 0.0
    %645 = vmatpush1.msra.mxu0 0.0
    %646 = vmatprep.subr.mxu0 0.0
    %647 = vmatpush1.msra.mxu0 0.0
    %648 = vmatprep.subr.mxu0 0.0
    %649 = vmatpush1.msra.mxu0 0.0
    %650 = vmatprep.subr.mxu0 0.0
    %651 = vmatpush1.msra.mxu0 0.0
    %652 = vmatprep.subr.mxu0 0.0
    %653 = vmatpush1.msra.mxu0 0.0
    %654 = vmatprep.subr.mxu0 0.0
    %655 = vmatpush1.msra.mxu0 0.0
    %656 = vmatprep.subr.mxu0 0.0
    %657 = vmatpush1.msra.mxu0 0.0
    %658 = vmatprep.subr.mxu0 0.0
    %659 = vmatpush1.msra.mxu0 0.0
    %660 = vmatprep.subr.mxu0 0.0
    %661 = vmatpush1.msra.mxu0 0.0
    %662 = vmatprep.subr.mxu0 0.0
    %663 = vmatpush1.msra.mxu0 0.0
    %664 = vmatprep.mubr.f32.mxu0 0.0
    %665 = vmatmul.mubr.f32.gmra.mrb[0].mxu0 %v598
    %v666 = vpop.f32.mrb[0].mxu0
    %v667 = vadd.f32 0.0, %v666
    %v668 = vpop.f32.mrb[0].mxu0
    %v669 = vadd.f32 0.0, %v668
    %670 = vdwg.mxu0
    %v671 = vsel %vm530, %v667, %v669
    %v672 = vadd.f32 %v170, %v671
    %v673 = vmax.f32 %v672, 0.0
    %674 = vst [vmem:[#allocation8] sm:$0xff] %v673
    // Predicated region
    $region26: #{tpu_custom_call.1} parent=1 // pred_check
      _
    $region27: #{tpu_custom_call.1} parent=1 // pred_check_branch
      %676 = sbr.rel (0) target = $region29
    $region28: #{tpu_custom_call.1} parent=1 // pred_region
      %s678 = ssub.s32 128, 128
      %679 = vsyncadd [#allocation4], %s678
      %s681 = sshll.u32 [#allocation8], 4
      %s682 = int_to_ptr.vmem [resolvable:$true] %s681
      %684 = dma.vmem_to_hbm [thread:$0]  %s682, 128, %s3, [#allocation4]
    $region29: #{tpu_custom_call.1} parent=1 // pred_fallthru
      _
    // Predicated region
    $region30: #{tpu_custom_call.1} parent=1 // pred_check
      _
    $region31: #{tpu_custom_call.1} parent=1 // pred_check_branch
      %686 = sbr.rel (0) target = $region33
    $region32: #{tpu_custom_call.1} parent=1 // pred_region
      %687 = dma.done [#allocation4], 128
    $region33: #{tpu_custom_call.1} parent=1 // pred_fallthru
      _
    %688 = vsyncpa [#allocation3], 1
    %689 = vsyncpa [#allocation6], 1
    %690 = vsyncpa [#allocation4], 1

</llo_original>
